<compile_context>
chip_gen: v7x
topology: tpu7x:2x2x1
jax: 0.10.0
libtpu: 0.0.40
codegen_flags: <defaults>
</compile_context>

<pallas_src>
import jax
import jax.numpy as jnp
from jax.experimental import pallas as pl
from jax.experimental.pallas import tpu as pltpu

# ---------------------------------------------------------------------------
# Architecture (static Python config, mirrors architecture_config)
# ---------------------------------------------------------------------------
INPUT_SIZE = 32
HIDDEN = (64, 64)
OUTPUT_SIZE = 8
LEAKY_SLOPE = 0.1
BN_EPS = 1e-5

H_PAD = 128     # hidden feature dims lane-padded to 128 (MXU-friendly)
OUT_PAD = 128   # output weight/bias padded to 128 for the MXU; store narrows to 8


def _round_up(n, m):
    return ((n + m - 1) // m) * m


def _choose_batch_tile(batch):
    """16-row-aligned batch tile, capped at 512 rows, aiming for >=4 grid steps
    (>=2 per v7x TensorCore so BlockSpec double-buffering can pipeline)."""
    bp = _round_up(batch, 16)
    if bp <= 128:
        return bp                                   # single small step
    return min(512, _round_up(pl.cdiv(bp, 4), 16))  # >=4 steps up to bp=2048


# ---------------------------------------------------------------------------
# Fused MLP kernel: 3 matmuls + activations in one body. BN already folded.
# ---------------------------------------------------------------------------
def _mlp_kernel(x_ref,
                w1_ref, b1_ref,   # layer 1: Linear with BN folded in
                w2_ref, b2_ref,   # layer 2: Linear
                wo_ref, bo_ref,   # output Linear (128-lane padded)
                o_ref):
    # Cast to bf16 in-kernel (no separate HBM cast pass in the wrapper).
    x = x_ref[...].astype(jnp.bfloat16)                        # [T, 32] bf16

    # --- hidden layer 1: Linear (BN folded) -> ReLU -> Dropout(identity, eval)
    h = jnp.dot(x, w1_ref[...], preferred_element_type=jnp.float32) + b1_ref[...]
    h = jnp.maximum(h, 0.0)

    # --- hidden layer 2: Linear -> LeakyReLU(0.1)
    h = jnp.dot(h.astype(jnp.bfloat16), w2_ref[...],
                preferred_element_type=jnp.float32) + b2_ref[...]
    h = jnp.where(h > 0, h, LEAKY_SLOPE * h)

    # --- output layer: matmul over 128 padded lanes, narrow store to 8 cols
    o = jnp.dot(h.astype(jnp.bfloat16), wo_ref[...],
                preferred_element_type=jnp.float32) + bo_ref[...]
    o_ref[...] = o[:, :OUTPUT_SIZE]


def generated_model_forward(x, params):
    """Fused MLP forward. x: [B, INPUT_SIZE] float32. Returns (position, None)."""
    (w1p, b1p, w2p, b2p, wop, bop) = params
    B = x.shape[0]

    tile = _choose_batch_tile(B)
    grid = (pl.cdiv(B, tile),)   # ragged last block handled by Pallas masking

    def const_spec(shape):
        # Parameters: same full block every step (block index never changes,
        # so the pipeliner only fetches them once; they stay VMEM-resident).
        return pl.BlockSpec(shape, lambda i: (0,) * len(shape))

    # Advisory cost for XLA's scheduler around this tiny custom call.
    flops = 2 * B * (INPUT_SIZE * H_PAD + H_PAD * H_PAD + H_PAD * OUT_PAD)
    param_bytes = sum(int(p.size) * p.dtype.itemsize for p in params)
    bytes_accessed = B * (INPUT_SIZE * 4 + OUTPUT_SIZE * 4) + param_bytes
    cost = pl.CostEstimate(flops=flops, transcendentals=0,
                           bytes_accessed=bytes_accessed)

    position = pl.pallas_call(
        _mlp_kernel,
        out_shape=jax.ShapeDtypeStruct((B, OUTPUT_SIZE), jnp.float32),
        grid_spec=pl.GridSpec(
            grid=grid,
            in_specs=[
                pl.BlockSpec((tile, INPUT_SIZE), lambda i: (i, 0)),   # x (f32)
                const_spec(w1p.shape), const_spec(b1p.shape),
                const_spec(w2p.shape), const_spec(b2p.shape),
                const_spec(wop.shape), const_spec(bop.shape),
            ],
            # Last dim == full array dim (8), so the (8,128) rule holds.
            out_specs=pl.BlockSpec((tile, OUTPUT_SIZE), lambda i: (i, 0)),
        ),
        compiler_params=pltpu.CompilerParams(
            dimension_semantics=("parallel",)),
        cost_estimate=cost,
    )(x, w1p, b1p, w2p, b2p, wop, bop)

    return position, None


# ---------------------------------------------------------------------------
# Deterministic raw parameter init (PyTorch-style uniform fan-in init).
# ---------------------------------------------------------------------------
def init_raw_params(key):
    def linear(k, fan_in, fan_out):
        kw, kb = jax.random.split(k)
        bound = 1.0 / jnp.sqrt(fan_in)
        # Stored as [in, out] (transpose of PyTorch's [out, in]).
        w = jax.random.uniform(kw, (fan_in, fan_out), jnp.float32, -bound, bound)
        b = jax.random.uniform(kb, (1, fan_out), jnp.float32, -bound, bound)
        return w, b

    k1, k2, k3, kbn = jax.random.split(key, 4)
    w1, b1 = linear(k1, INPUT_SIZE, HIDDEN[0])
    w2, b2 = linear(k2, HIDDEN[0], HIDDEN[1])
    wo, bo = linear(k3, HIDDEN[1], OUTPUT_SIZE)

    # BatchNorm1d(HIDDEN[0]) eval-mode parameters with non-trivial values.
    kg, kb_, km, kv = jax.random.split(kbn, 4)
    gamma = 1.0 + 0.1 * jax.random.normal(kg, (1, HIDDEN[0]), jnp.float32)
    beta = 0.1 * jax.random.normal(kb_, (1, HIDDEN[0]), jnp.float32)
    run_mean = 0.1 * jax.random.normal(km, (1, HIDDEN[0]), jnp.float32)
    run_var = jnp.abs(1.0 + 0.1 * jax.random.normal(kv, (1, HIDDEN[0]), jnp.float32))

    return (w1, b1, gamma, beta, run_mean, run_var, w2, b2, wo, bo)


# ---------------------------------------------------------------------------
# Wrapper-side param prep: fold BN into Linear1, lane-pad to 128, cast weights
# to bf16 (biases stay f32 for the f32 epilogue).
# ---------------------------------------------------------------------------
def prepare_params(raw):
    (w1, b1, gamma, beta, run_mean, run_var, w2, b2, wo, bo) = raw

    inv_std = 1.0 / jnp.sqrt(run_var + BN_EPS)
    s1 = gamma * inv_std                      # per-feature scale
    t1 = beta - run_mean * s1                 # per-feature shift
    w1f = w1 * s1                             # fold BN: column scale
    b1f = b1 * s1 + t1

    def pad_w(w, rows, cols):
        return jnp.pad(w, ((0, rows - w.shape[0]), (0, cols - w.shape[1])))

    def pad_b(b, cols):
        return jnp.pad(b, ((0, 0), (0, cols - b.shape[1])))

    w1p = pad_w(w1f, INPUT_SIZE, H_PAD).astype(jnp.bfloat16)
    b1p = pad_b(b1f, H_PAD).astype(jnp.float32)
    w2p = pad_w(w2, H_PAD, H_PAD).astype(jnp.bfloat16)
    b2p = pad_b(b2, H_PAD).astype(jnp.float32)
    wop = pad_w(wo, H_PAD, OUT_PAD).astype(jnp.bfloat16)
    bop = pad_b(bo, OUT_PAD).astype(jnp.float32)

    return (w1p, b1p, w2p, b2p, wop, bop)


# ---------------------------------------------------------------------------
# Pure-JAX reference (matches the kernel's bf16-at-MXU / f32-accumulate math).
# ---------------------------------------------------------------------------
def reference_forward(x, raw):
    (w1, b1, gamma, beta, run_mean, run_var, w2, b2, wo, bo) = raw
    inv_std = 1.0 / jnp.sqrt(run_var + BN_EPS)
    s1 = gamma * inv_std
    t1 = beta - run_mean * s1
    w1f, b1f = w1 * s1, b1 * s1 + t1

    def mm(a, w):
        a16 = a.astype(jnp.bfloat16).astype(jnp.float32)
        w16 = w.astype(jnp.bfloat16).astype(jnp.float32)
        return jnp.dot(a16, w16)

    h = mm(x, w1f) + b1f
    h = jnp.maximum(h, 0.0)
    h = mm(h, w2) + b2
    h = jnp.where(h > 0, h, LEAKY_SLOPE * h)
    return mm(h, wo) + bo


if __name__ == "__main__":
    key = jax.random.PRNGKey(0)
    kx, kp = jax.random.split(key)

    BATCH = 512  # -> tile=128, grid=4 (even; 2 steps per v7x TensorCore)
    x = jax.random.normal(kx, (BATCH, INPUT_SIZE), jnp.float32)
    raw = init_raw_params(kp)
    params = prepare_params(raw)

    position, aux = generated_model_forward(x, params)
    position = jax.block_until_ready(position)

    assert aux is None
    assert position.shape == (BATCH, OUTPUT_SIZE)

    ref = reference_forward(x, raw)
    assert jnp.allclose(position, ref, atol=1e-3, rtol=1e-3), "mismatch vs reference"

    print("KERNEL_OK")
</pallas_src>

<mosaic_0001>
module attributes {stable_mosaic.version = 11 : i64} {
  func.func @_mlp_kernel(%arg0: i32, %arg1: memref<128x32xf32, #tpu.memory_space<vmem>>, %arg2: memref<32x128xbf16, #tpu.memory_space<vmem>>, %arg3: memref<1x128xf32, #tpu.memory_space<vmem>>, %arg4: memref<128x128xbf16, #tpu.memory_space<vmem>>, %arg5: memref<1x128xf32, #tpu.memory_space<vmem>>, %arg6: memref<128x128xbf16, #tpu.memory_space<vmem>>, %arg7: memref<1x128xf32, #tpu.memory_space<vmem>>, %arg8: memref<128x8xf32, #tpu.memory_space<vmem>>) attributes {dimension_semantics = [#tpu.dimension_semantics<parallel>], iteration_bounds = array<i64: 4>, scalar_prefetch = 0 : i64, scratch_operands = 0 : i64, tpu.core_type = #tpu.core_type<tc>, window_params = [{transform_indices = @transform_0, window_bounds = array<i64: 128, 32>}, {pipeline_mode = #tpu.pipeline_mode<synchronous>, transform_indices = @transform_1, window_bounds = array<i64: 32, 128>}, {pipeline_mode = #tpu.pipeline_mode<synchronous>, transform_indices = @transform_2, window_bounds = array<i64: 1, 128>}, {pipeline_mode = #tpu.pipeline_mode<synchronous>, transform_indices = @transform_3, window_bounds = array<i64: 128, 128>}, {pipeline_mode = #tpu.pipeline_mode<synchronous>, transform_indices = @transform_4, window_bounds = array<i64: 1, 128>}, {pipeline_mode = #tpu.pipeline_mode<synchronous>, transform_indices = @transform_5, window_bounds = array<i64: 128, 128>}, {pipeline_mode = #tpu.pipeline_mode<synchronous>, transform_indices = @transform_6, window_bounds = array<i64: 1, 128>}, {transform_indices = @transform_7, window_bounds = array<i64: 128, 8>}]} {
    %c0 = arith.constant 0 : index
    %c0_0 = arith.constant 0 : index
    %0 = vector.load %arg1[%c0, %c0_0] : memref<128x32xf32, #tpu.memory_space<vmem>>, vector<128x32xf32>
    %1 = arith.truncf %0 : vector<128x32xf32> to vector<128x32xbf16>
    %c0_1 = arith.constant 0 : index
    %c0_2 = arith.constant 0 : index
    %2 = vector.load %arg2[%c0_1, %c0_2] : memref<32x128xbf16, #tpu.memory_space<vmem>>, vector<32x128xbf16>
    %cst = arith.constant dense<0.000000e+00> : vector<128x128xf32>
    %3 = tpu.matmul %1, %2, %cst {dimension_numbers = #tpu.dot_dimension_numbers<[1], [0], [0], [1], [0, 0, 1, 1], [], []>} : vector<128x32xbf16>, vector<32x128xbf16>, vector<128x128xf32> -> vector<128x128xf32>
    %c0_3 = arith.constant 0 : index
    %c0_4 = arith.constant 0 : index
    %4 = vector.load %arg3[%c0_3, %c0_4] : memref<1x128xf32, #tpu.memory_space<vmem>>, vector<1x128xf32>
    %5 = vector.broadcast %4 : vector<1x128xf32> to vector<128x128xf32>
    %6 = arith.addf %3, %5 : vector<128x128xf32>
    %cst_5 = arith.constant 0.000000e+00 : f32
    %7 = vector.broadcast %cst_5 : f32 to vector<128x128xf32>
    %8 = arith.maximumf %6, %7 : vector<128x128xf32>
    %9 = arith.truncf %8 : vector<128x128xf32> to vector<128x128xbf16>
    %c0_6 = arith.constant 0 : index
    %c0_7 = arith.constant 0 : index
    %10 = vector.load %arg4[%c0_6, %c0_7] : memref<128x128xbf16, #tpu.memory_space<vmem>>, vector<128x128xbf16>
    %cst_8 = arith.constant dense<0.000000e+00> : vector<128x128xf32>
    %11 = tpu.matmul %9, %10, %cst_8 {dimension_numbers = #tpu.dot_dimension_numbers<[1], [0], [0], [1], [0, 0, 1, 1], [], []>} : vector<128x128xbf16>, vector<128x128xbf16>, vector<128x128xf32> -> vector<128x128xf32>
    %c0_9 = arith.constant 0 : index
    %c0_10 = arith.constant 0 : index
    %12 = vector.load %arg5[%c0_9, %c0_10] : memref<1x128xf32, #tpu.memory_space<vmem>>, vector<1x128xf32>
    %13 = vector.broadcast %12 : vector<1x128xf32> to vector<128x128xf32>
    %14 = arith.addf %11, %13 : vector<128x128xf32>
    %cst_11 = arith.constant 0.000000e+00 : f32
    %15 = vector.broadcast %cst_11 : f32 to vector<128x128xf32>
    %16 = arith.cmpf ogt, %14, %15 : vector<128x128xf32>
    %cst_12 = arith.constant 1.000000e-01 : f32
    %17 = vector.broadcast %cst_12 : f32 to vector<128x128xf32>
    %18 = arith.mulf %17, %14 : vector<128x128xf32>
    %19 = arith.select %16, %14, %18 : vector<128x128xi1>, vector<128x128xf32>
    %20 = arith.truncf %19 : vector<128x128xf32> to vector<128x128xbf16>
    %c0_13 = arith.constant 0 : index
    %c0_14 = arith.constant 0 : index
    %21 = vector.load %arg6[%c0_13, %c0_14] : memref<128x128xbf16, #tpu.memory_space<vmem>>, vector<128x128xbf16>
    %cst_15 = arith.constant dense<0.000000e+00> : vector<128x128xf32>
    %22 = tpu.matmul %20, %21, %cst_15 {dimension_numbers = #tpu.dot_dimension_numbers<[1], [0], [0], [1], [0, 0, 1, 1], [], []>} : vector<128x128xbf16>, vector<128x128xbf16>, vector<128x128xf32> -> vector<128x128xf32>
    %c0_16 = arith.constant 0 : index
    %c0_17 = arith.constant 0 : index
    %23 = vector.load %arg7[%c0_16, %c0_17] : memref<1x128xf32, #tpu.memory_space<vmem>>, vector<1x128xf32>
    %24 = vector.broadcast %23 : vector<1x128xf32> to vector<128x128xf32>
    %25 = arith.addf %22, %24 : vector<128x128xf32>
    %26 = vector.extract_strided_slice %25 {offsets = [0, 0], sizes = [128, 8], strides = [1, 1]} : vector<128x128xf32> to vector<128x8xf32>
    %c0_18 = arith.constant 0 : index
    %c0_19 = arith.constant 0 : index
    %27 = vector.load %arg8[%c0_18, %c0_19] : memref<128x8xf32, #tpu.memory_space<vmem>>, vector<128x8xf32>
    tpu.vector_store %arg8[%c0_18, %c0_19], %26 {strides = array<i32>} : memref<128x8xf32, #tpu.memory_space<vmem>>, vector<128x8xf32>,
    return
  }
  func.func @transform_0(%arg0: i32) -> (i32, i32) {
    %c0_i32 = arith.constant 0 : i32
    %c0_i32_0 = arith.constant 0 : i32
    return %arg0, %c0_i32 : i32, i32
  }
  func.func @transform_1(%arg0: i32) -> (i32, i32) {
    %c0_i32 = arith.constant 0 : i32
    %c0_i32_0 = arith.constant 0 : i32
    %c0_i32_1 = arith.constant 0 : i32
    return %c0_i32, %c0_i32_0 : i32, i32
  }
  func.func @transform_2(%arg0: i32) -> (i32, i32) {
    %c0_i32 = arith.constant 0 : i32
    %c0_i32_0 = arith.constant 0 : i32
    %c0_i32_1 = arith.constant 0 : i32
    return %c0_i32, %c0_i32_0 : i32, i32
  }
  func.func @transform_3(%arg0: i32) -> (i32, i32) {
    %c0_i32 = arith.constant 0 : i32
    %c0_i32_0 = arith.constant 0 : i32
    %c0_i32_1 = arith.constant 0 : i32
    return %c0_i32, %c0_i32_0 : i32, i32
  }
  func.func @transform_4(%arg0: i32) -> (i32, i32) {
    %c0_i32 = arith.constant 0 : i32
    %c0_i32_0 = arith.constant 0 : i32
    %c0_i32_1 = arith.constant 0 : i32
    return %c0_i32, %c0_i32_0 : i32, i32
  }
  func.func @transform_5(%arg0: i32) -> (i32, i32) {
    %c0_i32 = arith.constant 0 : i32
    %c0_i32_0 = arith.constant 0 : i32
    %c0_i32_1 = arith.constant 0 : i32
    return %c0_i32, %c0_i32_0 : i32, i32
  }
  func.func @transform_6(%arg0: i32) -> (i32, i32) {
    %c0_i32 = arith.constant 0 : i32
    %c0_i32_0 = arith.constant 0 : i32
    %c0_i32_1 = arith.constant 0 : i32
    return %c0_i32, %c0_i32_0 : i32, i32
  }
  func.func @transform_7(%arg0: i32) -> (i32, i32) {
    %c0_i32 = arith.constant 0 : i32
    %c0_i32_0 = arith.constant 0 : i32
    return %arg0, %c0_i32 : i32, i32
  }
}

</mosaic_0001>

<llo_original>
// kernel: tpu_custom_call.1
$region0: #{tpu_custom_call.1}
  #allocation0 [shape = 'u32[]', space=smem, size = 0x4, offset = 0x4, fixed_abs, tag = 'smem constant byte address 0x4 - core index']
  #allocation1 [shape = 'u32[144,128]{1,0:T(1,128)}', space=vmem, size = 0x12000, scoped, tag = 'internal scratch']
  %s0 = inlined_call_operand.vmem [shape: f32[512,32], index: 0, kind: input, shape index: {}]
  %s1 = inlined_call_operand.vmem [shape: bf16[32,128], index: 1, kind: input, shape index: {}]
  %s2 = inlined_call_operand.vmem [shape: f32[1,128], index: 2, kind: input, shape index: {}]
  %s3 = inlined_call_operand.vmem [shape: bf16[128,128], index: 3, kind: input, shape index: {}]
  %s4 = inlined_call_operand.vmem [shape: f32[1,128], index: 4, kind: input, shape index: {}]
  %s5 = inlined_call_operand.vmem [shape: bf16[128,128], index: 5, kind: input, shape index: {}]
  %s6 = inlined_call_operand.vmem [shape: f32[1,128], index: 6, kind: input, shape index: {}]
  %s7 = inlined_call_operand.vmem [shape: f32[512,8], index: 7, kind: output, shape index: {}]
  %s8 = sld [smem:[#allocation0]]
  $region61: #{tpu_custom_call.1} parent=0
    _
  %s10 = ssub.s32 1, %s8
  %s11 = scalar_select 0, %s10, %s8
  loop: start=0, step=1, limit=6
  $region2: #{tpu_custom_call.1} parent=0 // loop_pre_header
    _
  $region3: #{tpu_custom_call.1} parent=0 // loop_header
    %s13 = sphi 0, %s17
    %p14 = scmp.ge.s32.totalorder %s13, 6
    %s23 = sphi 0, %s25
    %s26 = sphi 0, %s23
    %s27 = sphi 0, %s26
    %s43 = sphi 0, %s27
    %s47 = sphi 0, %s47
    %s49 = sphi 0, %s47
    %s50 = sphi 0, %s49
    %s64 = sphi 0, %s50
    %s68 = sphi 0, %s68
    %s70 = sphi 0, %s68
    %s71 = sphi 0, %s70
    %s85 = sphi 0, %s71
    %s89 = sphi 0, %s89
    %s91 = sphi 0, %s89
    %s92 = sphi 0, %s91
    %s106 = sphi 0, %s92
    %s110 = sphi 0, %s110
    %s112 = sphi 0, %s110
    %s113 = sphi 0, %s112
    %s127 = sphi 0, %s113
    %s131 = sphi 0, %s131
    %s133 = sphi 0, %s131
    %s134 = sphi 0, %s133
    %s148 = sphi 0, %s134
    %s152 = sphi 0, %s152
    %s154 = sphi 0, %s152
    %s155 = sphi 0, %s154
    %s169 = sphi 0, %s155
    %s175 = sphi 0, %s177
    %s178 = sphi 0, %s175
    %s179 = sphi 0, %s178
    %s195 = sphi 0, %s179
  $region4: #{tpu_custom_call.1} parent=0 // loop_header_branch
    %16 = sbr.rel (%p14) target = $region8
  $region5: #{tpu_custom_call.1} parent=0 // loop_body
    %s18 = ssub.s32 %s13, 1
    %s19 = ssub.s32 %s13, 2
    %s20 = sadd.s32 %s13, 1
    %s21 = ssub.s32 %s13, %s20
    %p22 = scmp.eq.s32.totalorder %s21, 0
    %s24 = sadd.s32 %s23, 1
    %s25 = scalar_select %p22, %s23, %s24
    %p28 = pneg %p22
    %p29 = scmp.eq.s32.totalorder %s13, 3
    %p30 = por %p28, %p29
    %p31 = scmp.ne.s32.totalorder %s23, %s26
    %p32 = scmp.eq.s32.totalorder %s13, 0
    %p33 = por %p31, %p32
    %p34 = scmp.ne.s32.totalorder %s23, %s26
    %p35 = scmp.eq.s32.totalorder %s18, 3
    %p36 = por %p34, %p35
    %p37 = scmp.ne.s32.totalorder %s26, %s27
    %p38 = scmp.eq.s32.totalorder %s18, 0
    %p39 = por %p37, %p38
    %p40 = scmp.ne.s32.totalorder %s26, %s27
    %p41 = scmp.eq.s32.totalorder %s19, 3
    %p42 = por %p40, %p41
    %p44 = scmp.ne.s32.totalorder %s27, %s43
    %p45 = scmp.eq.s32.totalorder %s19, 0
    %p46 = por %p44, %p45
    %s48 = sadd.s32 %s47, 1
    %p51 = scmp.eq.s32.totalorder %s13, 3
    %p52 = scmp.ne.s32.totalorder %s47, %s49
    %p53 = scmp.eq.s32.totalorder %s13, 0
    %p54 = por %p52, %p53
    %p55 = scmp.ne.s32.totalorder %s47, %s49
    %p56 = scmp.eq.s32.totalorder %s18, 3
    %p57 = por %p55, %p56
    %p58 = scmp.ne.s32.totalorder %s49, %s50
    %p59 = scmp.eq.s32.totalorder %s18, 0
    %p60 = por %p58, %p59
    %p61 = scmp.ne.s32.totalorder %s49, %s50
    %p62 = scmp.eq.s32.totalorder %s19, 3
    %p63 = por %p61, %p62
    %p65 = scmp.ne.s32.totalorder %s50, %s64
    %p66 = scmp.eq.s32.totalorder %s19, 0
    %p67 = por %p65, %p66
    %s69 = sadd.s32 %s68, 1
    %p72 = scmp.eq.s32.totalorder %s13, 3
    %p73 = scmp.ne.s32.totalorder %s68, %s70
    %p74 = scmp.eq.s32.totalorder %s13, 0
    %p75 = por %p73, %p74
    %p76 = scmp.ne.s32.totalorder %s68, %s70
    %p77 = scmp.eq.s32.totalorder %s18, 3
    %p78 = por %p76, %p77
    %p79 = scmp.ne.s32.totalorder %s70, %s71
    %p80 = scmp.eq.s32.totalorder %s18, 0
    %p81 = por %p79, %p80
    %p82 = scmp.ne.s32.totalorder %s70, %s71
    %p83 = scmp.eq.s32.totalorder %s19, 3
    %p84 = por %p82, %p83
    %p86 = scmp.ne.s32.totalorder %s71, %s85
    %p87 = scmp.eq.s32.totalorder %s19, 0
    %p88 = por %p86, %p87
    %s90 = sadd.s32 %s89, 1
    %p93 = scmp.eq.s32.totalorder %s13, 3
    %p94 = scmp.ne.s32.totalorder %s89, %s91
    %p95 = scmp.eq.s32.totalorder %s13, 0
    %p96 = por %p94, %p95
    %p97 = scmp.ne.s32.totalorder %s89, %s91
    %p98 = scmp.eq.s32.totalorder %s18, 3
    %p99 = por %p97, %p98
    %p100 = scmp.ne.s32.totalorder %s91, %s92
    %p101 = scmp.eq.s32.totalorder %s18, 0
    %p102 = por %p100, %p101
    %p103 = scmp.ne.s32.totalorder %s91, %s92
    %p104 = scmp.eq.s32.totalorder %s19, 3
    %p105 = por %p103, %p104
    %p107 = scmp.ne.s32.totalorder %s92, %s106
    %p108 = scmp.eq.s32.totalorder %s19, 0
    %p109 = por %p107, %p108
    %s111 = sadd.s32 %s110, 1
    %p114 = scmp.eq.s32.totalorder %s13, 3
    %p115 = scmp.ne.s32.totalorder %s110, %s112
    %p116 = scmp.eq.s32.totalorder %s13, 0
    %p117 = por %p115, %p116
    %p118 = scmp.ne.s32.totalorder %s110, %s112
    %p119 = scmp.eq.s32.totalorder %s18, 3
    %p120 = por %p118, %p119
    %p121 = scmp.ne.s32.totalorder %s112, %s113
    %p122 = scmp.eq.s32.totalorder %s18, 0
    %p123 = por %p121, %p122
    %p124 = scmp.ne.s32.totalorder %s112, %s113
    %p125 = scmp.eq.s32.totalorder %s19, 3
    %p126 = por %p124, %p125
    %p128 = scmp.ne.s32.totalorder %s113, %s127
    %p129 = scmp.eq.s32.totalorder %s19, 0
    %p130 = por %p128, %p129
    %s132 = sadd.s32 %s131, 1
    %p135 = scmp.eq.s32.totalorder %s13, 3
    %p136 = scmp.ne.s32.totalorder %s131, %s133
    %p137 = scmp.eq.s32.totalorder %s13, 0
    %p138 = por %p136, %p137
    %p139 = scmp.ne.s32.totalorder %s131, %s133
    %p140 = scmp.eq.s32.totalorder %s18, 3
    %p141 = por %p139, %p140
    %p142 = scmp.ne.s32.totalorder %s133, %s134
    %p143 = scmp.eq.s32.totalorder %s18, 0
    %p144 = por %p142, %p143
    %p145 = scmp.ne.s32.totalorder %s133, %s134
    %p146 = scmp.eq.s32.totalorder %s19, 3
    %p147 = por %p145, %p146
    %p149 = scmp.ne.s32.totalorder %s134, %s148
    %p150 = scmp.eq.s32.totalorder %s19, 0
    %p151 = por %p149, %p150
    %s153 = sadd.s32 %s152, 1
    %p156 = scmp.eq.s32.totalorder %s13, 3
    %p157 = scmp.ne.s32.totalorder %s152, %s154
    %p158 = scmp.eq.s32.totalorder %s13, 0
    %p159 = por %p157, %p158
    %p160 = scmp.ne.s32.totalorder %s152, %s154
    %p161 = scmp.eq.s32.totalorder %s18, 3
    %p162 = por %p160, %p161
    %p163 = scmp.ne.s32.totalorder %s154, %s155
    %p164 = scmp.eq.s32.totalorder %s18, 0
    %p165 = por %p163, %p164
    %p166 = scmp.ne.s32.totalorder %s154, %s155
    %p167 = scmp.eq.s32.totalorder %s19, 3
    %p168 = por %p166, %p167
    %p170 = scmp.ne.s32.totalorder %s155, %s169
    %p171 = scmp.eq.s32.totalorder %s19, 0
    %p172 = por %p170, %p171
    %s173 = ssub.s32 %s13, %s20
    %p174 = scmp.eq.s32.totalorder %s173, 0
    %s176 = sadd.s32 %s175, 1
    %s177 = scalar_select %p174, %s175, %s176
    %p180 = pneg %p174
    %p181 = scmp.eq.s32.totalorder %s13, 3
    %p182 = por %p180, %p181
    %p183 = scmp.ne.s32.totalorder %s175, %s178
    %p184 = scmp.eq.s32.totalorder %s13, 0
    %p185 = por %p183, %p184
    %p186 = scmp.ne.s32.totalorder %s175, %s178
    %p187 = scmp.eq.s32.totalorder %s18, 3
    %p188 = por %p186, %p187
    %p189 = scmp.ne.s32.totalorder %s178, %s179
    %p190 = scmp.eq.s32.totalorder %s18, 0
    %p191 = por %p189, %p190
    %p192 = scmp.ne.s32.totalorder %s178, %s179
    %p193 = scmp.eq.s32.totalorder %s19, 3
    %p194 = por %p192, %p193
    %p196 = scmp.ne.s32.totalorder %s179, %s195
    %p197 = scmp.eq.s32.totalorder %s19, 0
    %p198 = por %p196, %p197
    %p199 = scmp.le.s32.totalorder 1, %s13
    %p200 = scmp.lt.s32.totalorder %s13, 5
    %p201 = pnand %p199, %p200
    %p202 = pneg %p201
    // Predicated region
    $region9: #{tpu_custom_call.1} parent=5 // pred_check
      _
    $region10: #{tpu_custom_call.1} parent=5 // pred_check_branch
      %204 = sbr.rel (%p201) target = $region12
    $region11: #{tpu_custom_call.1} parent=5 // pred_region
      %s205 = ssub.s32 %s13, 1
      // Predicated region
      $region13: #{tpu_custom_call.1} parent=11 // pred_check
        %p206 = pneg %p60
      $region14: #{tpu_custom_call.1} parent=11 // pred_check_branch
        %208 = sbr.rel (%p206) target = $region16
      $region15: #{tpu_custom_call.1} parent=11 // pred_region
        _
      $region16: #{tpu_custom_call.1} parent=11 // pred_fallthru
        _
      // Predicated region
      $region17: #{tpu_custom_call.1} parent=11 // pred_check
        %p209 = pneg %p81
      $region18: #{tpu_custom_call.1} parent=11 // pred_check_branch
        %211 = sbr.rel (%p209) target = $region20
      $region19: #{tpu_custom_call.1} parent=11 // pred_region
        _
      $region20: #{tpu_custom_call.1} parent=11 // pred_fallthru
        _
      // Predicated region
      $region21: #{tpu_custom_call.1} parent=11 // pred_check
        %p212 = pneg %p102
      $region22: #{tpu_custom_call.1} parent=11 // pred_check_branch
        %214 = sbr.rel (%p212) target = $region24
      $region23: #{tpu_custom_call.1} parent=11 // pred_region
        _
      $region24: #{tpu_custom_call.1} parent=11 // pred_fallthru
        _
      // Predicated region
      $region25: #{tpu_custom_call.1} parent=11 // pred_check
        %p215 = pneg %p123
      $region26: #{tpu_custom_call.1} parent=11 // pred_check_branch
        %217 = sbr.rel (%p215) target = $region28
      $region27: #{tpu_custom_call.1} parent=11 // pred_region
        _
      $region28: #{tpu_custom_call.1} parent=11 // pred_fallthru
        _
      // Predicated region
      $region29: #{tpu_custom_call.1} parent=11 // pred_check
        %p218 = pneg %p144
      $region30: #{tpu_custom_call.1} parent=11 // pred_check_branch
        %220 = sbr.rel (%p218) target = $region32
      $region31: #{tpu_custom_call.1} parent=11 // pred_region
        _
      $region32: #{tpu_custom_call.1} parent=11 // pred_fallthru
        _
      // Predicated region
      $region33: #{tpu_custom_call.1} parent=11 // pred_check
        %p221 = pneg %p165
      $region34: #{tpu_custom_call.1} parent=11 // pred_check_branch
        %223 = sbr.rel (%p221) target = $region36
      $region35: #{tpu_custom_call.1} parent=11 // pred_region
        _
      $region36: #{tpu_custom_call.1} parent=11 // pred_fallthru
        _
    $region12: #{tpu_custom_call.1} parent=5 // pred_fallthru
      _
    %p224 = scmp.lt.s32.totalorder %s13, 4
    // Predicated region
    $region37: #{tpu_custom_call.1} parent=5 // pred_check
      %p225 = pneg %p224
    $region38: #{tpu_custom_call.1} parent=5 // pred_check_branch
      %227 = sbr.rel (%p225) target = $region40
    $region39: #{tpu_custom_call.1} parent=5 // pred_region
      // Predicated region
      $region41: #{tpu_custom_call.1} parent=39 // pred_check
        %p228 = pneg %p33
      $region42: #{tpu_custom_call.1} parent=39 // pred_check_branch
        %230 = sbr.rel (%p228) target = $region44
      $region43: #{tpu_custom_call.1} parent=39 // pred_region
        %s231 = smul.u32 16, %s13
        %p232 = scmp.lt.s32.totalorder %s231, 63
        %s233 = scalar_select %p232, %s231, 63
        %s234 = smul.addr %s233, 8
        %s235 = scalar_lea.vmem %s0, %s234
        %s236 = smul.u32 16, %s13
      $region44: #{tpu_custom_call.1} parent=39 // pred_fallthru
        _
    $region40: #{tpu_custom_call.1} parent=5 // pred_fallthru
      _
    %p237 = scmp.le.s32.totalorder 1, %s13
    %p238 = scmp.lt.s32.totalorder %s13, 5
    %p239 = pnand %p237, %p238
    %p240 = pneg %p239
    // Predicated region
    $region45: #{tpu_custom_call.1} parent=5 // pred_check
      _
    $region46: #{tpu_custom_call.1} parent=5 // pred_check_branch
      %242 = sbr.rel (%p239) target = $region48
    $region47: #{tpu_custom_call.1} parent=5 // pred_region
      %s243 = ssub.s32 %s13, 1
      %s244 = smul.u32 16, %s18
      %p245 = scmp.lt.s32.totalorder %s244, 63
      %s246 = scalar_select %p245, %s244, 63
      %s247 = smul.addr %s246, 8
      %s248 = scalar_lea.vmem %s0, %s247
      %p249 = pneg %p39
      %p250 = pneg %p36
      %p251 = pneg %p60
      %p252 = pneg %p57
      %p253 = pneg %p81
      %p254 = pneg %p78
      %p255 = pneg %p102
      %p256 = pneg %p99
      %p257 = pneg %p123
      %p258 = pneg %p120
      %p259 = pneg %p144
      %p260 = pneg %p141
      %p261 = pneg %p165
      %p262 = pneg %p162
      %p263 = pneg %p191
      %p264 = pneg %p188
      %s265 = smul.u32 16, %s18
      %p266 = scmp.lt.s32.totalorder %s265, 63
      %s267 = scalar_select %p266, %s265, 63
      %s268 = smul.addr %s267, 8
      %s269 = scalar_lea.vmem %s7, %s268
      %s270 = smul.u32 16, %s18
      %p271 = scmp.lt.s32.totalorder %s270, 63
      %s272 = scalar_select %p271, %s270, 63
      %s273 = smul.addr %s272, 8
      %s274 = scalar_lea.vmem %s0, %s273
      %s275 = smul.u32 16, %s18
      %s276 = smul.u32 16, %s18
      %p277 = scmp.lt.s32.totalorder %s276, 63
      %s278 = scalar_select %p277, %s276, 63
      %s279 = smul.addr %s278, 8
      %s280 = scalar_lea.vmem %s7, %s279
      %s281 = smul.u32 16, %s18
      %v283 = vld [vmem:[%s274] sm:$0xff]
      %v284 = vld [vmem:[%s274 + $0x8] sm:$0xff]
      %v285 = vld [vmem:[%s274 + $0x10] sm:$0xff]
      %v286 = vld [vmem:[%s274 + $0x18] sm:$0xff]
      %v287 = vld [vmem:[%s274 + $0x20] sm:$0xff]
      %v288 = vld [vmem:[%s274 + $0x28] sm:$0xff]
      %v289 = vld [vmem:[%s274 + $0x30] sm:$0xff]
      %v290 = vld [vmem:[%s274 + $0x38] sm:$0xff]
      %v291 = vld [vmem:[%s274 + $0x40] sm:$0xff]
      %v292 = vld [vmem:[%s274 + $0x48] sm:$0xff]
      %v293 = vld [vmem:[%s274 + $0x50] sm:$0xff]
      %v294 = vld [vmem:[%s274 + $0x58] sm:$0xff]
      %v295 = vld [vmem:[%s274 + $0x60] sm:$0xff]
      %v296 = vld [vmem:[%s274 + $0x68] sm:$0xff]
      %v297 = vld [vmem:[%s274 + $0x70] sm:$0xff]
      %v298 = vld [vmem:[%s274 + $0x78] sm:$0xff]
      %v299 = vpack.c.bf16 %v284, %v283
      %v300 = vpack.c.bf16 %v286, %v285
      %v301 = vpack.c.bf16 %v288, %v287
      %v302 = vpack.c.bf16 %v290, %v289
      %v303 = vpack.c.bf16 %v292, %v291
      %v304 = vpack.c.bf16 %v294, %v293
      %v305 = vpack.c.bf16 %v296, %v295
      %v306 = vpack.c.bf16 %v298, %v297
      %v307 = vld [vmem:[%s1] sm:$0xf]
      %v308 = vld [vmem:[%s1 + $0x4] sm:$0xf]
      %v309 = vld [vmem:[%s1 + $0x8] sm:$0xf]
      %v310 = vld [vmem:[%s1 + $0xc] sm:$0xf]
      %v311 = vld [vmem:[%s2] sm:$0x1]
      %v313 = vlaneseq
      %v314 = vshrl.u32 %v313, 7
      %v315 = vsub.s32 0, %v314
      %v316 = vrot.slane %v311, %v315
      %v322 = vunpack.c.l.b16 %v307
      %v323 = vunpack.c.l.b16 %v308
      %v324 = vunpack.c.l.b16 %v309
      %v325 = vunpack.c.l.b16 %v310
      %v326 = vpack.c.b16 %v323, %v322
      %v327 = vpack.c.b16 %v325, %v324
      %vm330 = vcmask 261120
      %v332 = vsel %vm330, %v299, 0
      %v335 = vsel %vm330, %v300, 0
      %v338 = vsel %vm330, %v301, 0
      %v341 = vsel %vm330, %v302, 0
      %v344 = vsel %vm330, %v303, 0
      %v347 = vsel %vm330, %v304, 0
      %v350 = vsel %vm330, %v305, 0
      %v353 = vsel %vm330, %v306, 0
      %355 = vmatprep.subr.bf16.mxu0 0
      %356 = vmatpush1.bf16.msra.mxu0 %v326
      %357 = vmatprep.subr.bf16.mxu0 0
      %358 = vmatpush1.bf16.msra.mxu0 %v327
      %359 = vmatprep.subr.bf16.mxu0 0
      %360 = vmatpush1.bf16.msra.mxu0 0
      %361 = vmatprep.subr.bf16.mxu0 0
      %362 = vmatpush1.bf16.msra.mxu0 0
      %363 = vmatprep.subr.bf16.mxu0 0
      %364 = vmatpush1.bf16.msra.mxu0 0
      %365 = vmatprep.subr.bf16.mxu0 0
      %366 = vmatpush1.bf16.msra.mxu0 0
      %367 = vmatprep.subr.bf16.mxu0 0
      %368 = vmatpush1.bf16.msra.mxu0 0
      %369 = vmatprep.subr.bf16.mxu0 0
      %370 = vmatpush1.bf16.msra.mxu0 0
      %371 = vmatprep.subr.bf16.mxu0 0
      %372 = vmatpush1.bf16.msra.mxu0 0
      %373 = vmatprep.subr.bf16.mxu0 0
      %374 = vmatpush1.bf16.msra.mxu0 0
      %375 = vmatprep.subr.bf16.mxu0 0
      %376 = vmatpush1.bf16.msra.mxu0 0
      %377 = vmatprep.subr.bf16.mxu0 0
      %378 = vmatpush1.bf16.msra.mxu0 0
      %379 = vmatprep.subr.bf16.mxu0 0
      %380 = vmatpush1.bf16.msra.mxu0 0
      %381 = vmatprep.subr.bf16.mxu0 0
      %382 = vmatpush1.bf16.msra.mxu0 0
      %383 = vmatprep.subr.bf16.mxu0 0
      %384 = vmatpush1.bf16.msra.mxu0 0
      %385 = vmatprep.subr.bf16.mxu0 0
      %386 = vmatpush1.bf16.msra.mxu0 0
      %387 = vmatprep.mubr.bf16.mxu0 0
      %388 = vmatmul.mubr.bf16.gmra.mrb[0].mxu0 %v332
      %v389 = vpop.f32.mrb[0].mxu0
      %v390 = vadd.f32 %v316, %v389
      %v391 = vpop.f32.mrb[0].mxu0
      %v392 = vpop.f32.mrb[0].mxu0
      %v393 = vadd.f32 %v316, %v392
      %v394 = vpop.f32.mrb[0].mxu0
      %395 = vmatprep.mubr.bf16.mxu0 0
      %396 = vmatmul.mubr.bf16.gmra.mrb[0].mxu0 %v335
      %v397 = vpop.f32.mrb[0].mxu0
      %v398 = vadd.f32 %v316, %v397
      %v399 = vpop.f32.mrb[0].mxu0
      %v400 = vpop.f32.mrb[0].mxu0
      %v401 = vadd.f32 %v316, %v400
      %v402 = vpop.f32.mrb[0].mxu0
      %403 = vmatprep.mubr.bf16.mxu0 0
      %404 = vmatmul.mubr.bf16.gmra.mrb[0].mxu0 %v338
      %v405 = vpop.f32.mrb[0].mxu0
      %v406 = vadd.f32 %v316, %v405
      %v407 = vpop.f32.mrb[0].mxu0
      %v408 = vpop.f32.mrb[0].mxu0
      %v409 = vadd.f32 %v316, %v408
      %v410 = vpop.f32.mrb[0].mxu0
      %411 = vmatprep.mubr.bf16.mxu0 0
      %412 = vmatmul.mubr.bf16.gmra.mrb[0].mxu0 %v341
      %v413 = vpop.f32.mrb[0].mxu0
      %v414 = vadd.f32 %v316, %v413
      %v415 = vpop.f32.mrb[0].mxu0
      %v416 = vpop.f32.mrb[0].mxu0
      %v417 = vadd.f32 %v316, %v416
      %v418 = vpop.f32.mrb[0].mxu0
      %419 = vmatprep.mubr.bf16.mxu0 0
      %420 = vmatmul.mubr.bf16.gmra.mrb[0].mxu0 %v344
      %v421 = vpop.f32.mrb[0].mxu0
      %v422 = vadd.f32 %v316, %v421
      %v423 = vpop.f32.mrb[0].mxu0
      %v424 = vpop.f32.mrb[0].mxu0
      %v425 = vadd.f32 %v316, %v424
      %v426 = vpop.f32.mrb[0].mxu0
      %427 = vmatprep.mubr.bf16.mxu0 0
      %428 = vmatmul.mubr.bf16.gmra.mrb[0].mxu0 %v347
      %v429 = vpop.f32.mrb[0].mxu0
      %v430 = vadd.f32 %v316, %v429
      %v431 = vpop.f32.mrb[0].mxu0
      %v432 = vpop.f32.mrb[0].mxu0
      %v433 = vadd.f32 %v316, %v432
      %v434 = vpop.f32.mrb[0].mxu0
      %435 = vmatprep.mubr.bf16.mxu0 0
      %436 = vmatmul.mubr.bf16.gmra.mrb[0].mxu0 %v350
      %v437 = vpop.f32.mrb[0].mxu0
      %v438 = vadd.f32 %v316, %v437
      %v439 = vpop.f32.mrb[0].mxu0
      %v440 = vpop.f32.mrb[0].mxu0
      %v441 = vadd.f32 %v316, %v440
      %v442 = vpop.f32.mrb[0].mxu0
      %443 = vmatprep.mubr.bf16.mxu0 0
      %444 = vmatmul.mubr.bf16.gmra.mrb[0].mxu0 %v353
      %v445 = vpop.f32.mrb[0].mxu0
      %v446 = vadd.f32 %v316, %v445
      %v447 = vpop.f32.mrb[0].mxu0
      %v448 = vpop.f32.mrb[0].mxu0
      %v449 = vadd.f32 %v316, %v448
      %v450 = vpop.f32.mrb[0].mxu0
      %451 = vdwg.mxu0
      %v452 = vmax.f32 %v390, 0.0
      %v453 = vmax.f32 %v393, 0.0
      %v454 = vmax.f32 %v398, 0.0
      %v455 = vmax.f32 %v401, 0.0
      %v456 = vmax.f32 %v406, 0.0
      %v457 = vmax.f32 %v409, 0.0
      %v458 = vmax.f32 %v414, 0.0
      %v459 = vmax.f32 %v417, 0.0
      %v460 = vmax.f32 %v422, 0.0
      %v461 = vmax.f32 %v425, 0.0
      %v462 = vmax.f32 %v430, 0.0
      %v463 = vmax.f32 %v433, 0.0
      %v464 = vmax.f32 %v438, 0.0
      %v465 = vmax.f32 %v441, 0.0
      %v466 = vmax.f32 %v446, 0.0
      %v467 = vmax.f32 %v449, 0.0
      %v468 = vpack.c.bf16 %v453, %v452
      %v469 = vpack.c.bf16 %v455, %v454
      %v470 = vpack.c.bf16 %v457, %v456
      %v471 = vpack.c.bf16 %v459, %v458
      %v472 = vpack.c.bf16 %v461, %v460
      %v473 = vpack.c.bf16 %v463, %v462
      %v474 = vpack.c.bf16 %v465, %v464
      %v475 = vpack.c.bf16 %v467, %v466
      %v476 = vld [vmem:[%s3] sm:$0xf]
      %v477 = vld [vmem:[%s3 + $0x4] sm:$0xf]
      %v478 = vld [vmem:[%s3 + $0x8] sm:$0xf]
      %v479 = vld [vmem:[%s3 + $0xc] sm:$0xf]
      %v480 = vld [vmem:[%s3 + $0x10] sm:$0xf]
      %v481 = vld [vmem:[%s3 + $0x14] sm:$0xf]
      %v482 = vld [vmem:[%s3 + $0x18] sm:$0xf]
      %v483 = vld [vmem:[%s3 + $0x1c] sm:$0xf]
      %v484 = vld [vmem:[%s3 + $0x20] sm:$0xf]
      %v485 = vld [vmem:[%s3 + $0x24] sm:$0xf]
      %v486 = vld [vmem:[%s3 + $0x28] sm:$0xf]
      %v487 = vld [vmem:[%s3 + $0x2c] sm:$0xf]
      %v488 = vld [vmem:[%s3 + $0x30] sm:$0xf]
      %v489 = vld [vmem:[%s3 + $0x34] sm:$0xf]
      %v490 = vld [vmem:[%s3 + $0x38] sm:$0xf]
      %v491 = vld [vmem:[%s3 + $0x3c] sm:$0xf]
      %v492 = vld [vmem:[%s4] sm:$0x1]
      %v494 = vlaneseq
      %v495 = vshrl.u32 %v494, 7
      %v496 = vsub.s32 0, %v495
      %v497 = vrot.slane %v492, %v496
      %v515 = vunpack.c.l.b16 %v476
      %v516 = vunpack.c.l.b16 %v477
      %v517 = vunpack.c.l.b16 %v478
      %v518 = vunpack.c.l.b16 %v479
      %v519 = vunpack.c.l.b16 %v480
      %v520 = vunpack.c.l.b16 %v481
      %v521 = vunpack.c.l.b16 %v482
      %v522 = vunpack.c.l.b16 %v483
      %v523 = vunpack.c.l.b16 %v484
      %v524 = vunpack.c.l.b16 %v485
      %v525 = vunpack.c.l.b16 %v486
      %v526 = vunpack.c.l.b16 %v487
      %v527 = vunpack.c.l.b16 %v488
      %v528 = vunpack.c.l.b16 %v489
      %v529 = vunpack.c.l.b16 %v490
      %v530 = vunpack.c.l.b16 %v491
      %v531 = vpack.c.b16 %v516, %v515
      %v532 = vpack.c.b16 %v518, %v517
      %v533 = vpack.c.b16 %v520, %v519
      %v534 = vpack.c.b16 %v522, %v521
      %v535 = vpack.c.b16 %v524, %v523
      %v536 = vpack.c.b16 %v526, %v525
      %v537 = vpack.c.b16 %v528, %v527
      %v538 = vpack.c.b16 %v530, %v529
      %547 = vmatprep.subr.bf16.mxu0 0
      %548 = vmatpush1.bf16.msra.mxu0 %v531
      %549 = vmatprep.subr.bf16.mxu0 0
      %550 = vmatpush1.bf16.msra.mxu0 %v532
      %551 = vmatprep.subr.bf16.mxu0 0
      %552 = vmatpush1.bf16.msra.mxu0 %v533
      %553 = vmatprep.subr.bf16.mxu0 0
      %554 = vmatpush1.bf16.msra.mxu0 %v534
      %555 = vmatprep.subr.bf16.mxu0 0
      %556 = vmatpush1.bf16.msra.mxu0 %v535
      %557 = vmatprep.subr.bf16.mxu0 0
      %558 = vmatpush1.bf16.msra.mxu0 %v536
      %559 = vmatprep.subr.bf16.mxu0 0
      %560 = vmatpush1.bf16.msra.mxu0 %v537
      %561 = vmatprep.subr.bf16.mxu0 0
      %562 = vmatpush1.bf16.msra.mxu0 %v538
      %563 = vmatprep.subr.bf16.mxu0 0
      %564 = vmatpush1.bf16.msra.mxu0 0
      %565 = vmatprep.subr.bf16.mxu0 0
      %566 = vmatpush1.bf16.msra.mxu0 0
      %567 = vmatprep.subr.bf16.mxu0 0
      %568 = vmatpush1.bf16.msra.mxu0 0
      %569 = vmatprep.subr.bf16.mxu0 0
      %570 = vmatpush1.bf16.msra.mxu0 0
      %571 = vmatprep.subr.bf16.mxu0 0
      %572 = vmatpush1.bf16.msra.mxu0 0
      %573 = vmatprep.subr.bf16.mxu0 0
      %574 = vmatpush1.bf16.msra.mxu0 0
      %575 = vmatprep.subr.bf16.mxu0 0
      %576 = vmatpush1.bf16.msra.mxu0 0
      %577 = vmatprep.subr.bf16.mxu0 0
      %578 = vmatpush1.bf16.msra.mxu0 0
      %579 = vmatprep.mubr.bf16.mxu0 0
      %580 = vmatmul.mubr.bf16.gmra.mrb[0].mxu0 %v468
      %v581 = vpop.f32.mrb[0].mxu0
      %v582 = vadd.f32 %v497, %v581
      %v583 = vpop.f32.mrb[0].mxu0
      %v584 = vpop.f32.mrb[0].mxu0
      %v585 = vadd.f32 %v497, %v584
      %v586 = vpop.f32.mrb[0].mxu0
      %587 = vmatprep.mubr.bf16.mxu0 0
      %588 = vmatmul.mubr.bf16.gmra.mrb[0].mxu0 %v469
      %v589 = vpop.f32.mrb[0].mxu0
      %v590 = vadd.f32 %v497, %v589
      %v591 = vpop.f32.mrb[0].mxu0
      %v592 = vpop.f32.mrb[0].mxu0
      %v593 = vadd.f32 %v497, %v592
      %v594 = vpop.f32.mrb[0].mxu0
      %595 = vmatprep.mubr.bf16.mxu0 0
      %596 = vmatmul.mubr.bf16.gmra.mrb[0].mxu0 %v470
      %v597 = vpop.f32.mrb[0].mxu0
      %v598 = vadd.f32 %v497, %v597
      %v599 = vpop.f32.mrb[0].mxu0
      %v600 = vpop.f32.mrb[0].mxu0
      %v601 = vadd.f32 %v497, %v600
      %v602 = vpop.f32.mrb[0].mxu0
      %603 = vmatprep.mubr.bf16.mxu0 0
      %604 = vmatmul.mubr.bf16.gmra.mrb[0].mxu0 %v471
      %v605 = vpop.f32.mrb[0].mxu0
      %v606 = vadd.f32 %v497, %v605
      %v607 = vpop.f32.mrb[0].mxu0
      %v608 = vpop.f32.mrb[0].mxu0
      %v609 = vadd.f32 %v497, %v608
      %v610 = vpop.f32.mrb[0].mxu0
      %611 = vmatprep.mubr.bf16.mxu0 0
      %612 = vmatmul.mubr.bf16.gmra.mrb[0].mxu0 %v472
      %v613 = vpop.f32.mrb[0].mxu0
      %v614 = vadd.f32 %v497, %v613
      %v615 = vpop.f32.mrb[0].mxu0
      %v616 = vpop.f32.mrb[0].mxu0
      %v617 = vadd.f32 %v497, %v616
      %v618 = vpop.f32.mrb[0].mxu0
      %619 = vmatprep.mubr.bf16.mxu0 0
      %620 = vmatmul.mubr.bf16.gmra.mrb[0].mxu0 %v473
      %v621 = vpop.f32.mrb[0].mxu0
      %v622 = vadd.f32 %v497, %v621
      %v623 = vpop.f32.mrb[0].mxu0
      %v624 = vpop.f32.mrb[0].mxu0
      %v625 = vadd.f32 %v497, %v624
      %v626 = vpop.f32.mrb[0].mxu0
      %627 = vmatprep.mubr.bf16.mxu0 0
      %628 = vmatmul.mubr.bf16.gmra.mrb[0].mxu0 %v474
      %v629 = vpop.f32.mrb[0].mxu0
      %v630 = vadd.f32 %v497, %v629
      %v631 = vpop.f32.mrb[0].mxu0
      %v632 = vpop.f32.mrb[0].mxu0
      %v633 = vadd.f32 %v497, %v632
      %v634 = vpop.f32.mrb[0].mxu0
      %635 = vmatprep.mubr.bf16.mxu0 0
      %636 = vmatmul.mubr.bf16.gmra.mrb[0].mxu0 %v475
      %v637 = vpop.f32.mrb[0].mxu0
      %v638 = vadd.f32 %v497, %v637
      %v639 = vpop.f32.mrb[0].mxu0
      %v640 = vpop.f32.mrb[0].mxu0
      %v641 = vadd.f32 %v497, %v640
      %v642 = vpop.f32.mrb[0].mxu0
      %643 = vdwg.mxu0
      %vm644 = vcmp.gt.f32.partialorder %v582, 0.0
      %vm645 = vcmp.gt.f32.partialorder %v585, 0.0
      %vm646 = vcmp.gt.f32.partialorder %v590, 0.0
      %vm647 = vcmp.gt.f32.partialorder %v593, 0.0
      %vm648 = vcmp.gt.f32.partialorder %v598, 0.0
      %vm649 = vcmp.gt.f32.partialorder %v601, 0.0
      %vm650 = vcmp.gt.f32.partialorder %v606, 0.0
      %vm651 = vcmp.gt.f32.partialorder %v609, 0.0
      %vm652 = vcmp.gt.f32.partialorder %v614, 0.0
      %vm653 = vcmp.gt.f32.partialorder %v617, 0.0
      %vm654 = vcmp.gt.f32.partialorder %v622, 0.0
      %vm655 = vcmp.gt.f32.partialorder %v625, 0.0
      %vm656 = vcmp.gt.f32.partialorder %v630, 0.0
      %vm657 = vcmp.gt.f32.partialorder %v633, 0.0
      %vm658 = vcmp.gt.f32.partialorder %v638, 0.0
      %vm659 = vcmp.gt.f32.partialorder %v641, 0.0
      %v660 = vmul.f32 %v582, 0.1
      %v661 = vmul.f32 %v585, 0.1
      %v662 = vmul.f32 %v590, 0.1
      %v663 = vmul.f32 %v593, 0.1
      %v664 = vmul.f32 %v598, 0.1
      %v665 = vmul.f32 %v601, 0.1
      %v666 = vmul.f32 %v606, 0.1
      %v667 = vmul.f32 %v609, 0.1
      %v668 = vmul.f32 %v614, 0.1
      %v669 = vmul.f32 %v617, 0.1
      %v670 = vmul.f32 %v622, 0.1
      %v671 = vmul.f32 %v625, 0.1
      %v672 = vmul.f32 %v630, 0.1
      %v673 = vmul.f32 %v633, 0.1
      %v674 = vmul.f32 %v638, 0.1
      %v675 = vmul.f32 %v641, 0.1
      %v676 = vsel %vm644, %v582, %v660
      %v677 = vsel %vm645, %v585, %v661
      %v678 = vsel %vm646, %v590, %v662
      %v679 = vsel %vm647, %v593, %v663
      %v680 = vsel %vm648, %v598, %v664
      %v681 = vsel %vm649, %v601, %v665
      %v682 = vsel %vm650, %v606, %v666
      %v683 = vsel %vm651, %v609, %v667
      %v684 = vsel %vm652, %v614, %v668
      %v685 = vsel %vm653, %v617, %v669
      %v686 = vsel %vm654, %v622, %v670
      %v687 = vsel %vm655, %v625, %v671
      %v688 = vsel %vm656, %v630, %v672
      %v689 = vsel %vm657, %v633, %v673
      %v690 = vsel %vm658, %v638, %v674
      %v691 = vsel %vm659, %v641, %v675
      %v692 = vpack.c.bf16 %v677, %v676
      %v693 = vpack.c.bf16 %v679, %v678
      %v694 = vpack.c.bf16 %v681, %v680
      %v695 = vpack.c.bf16 %v683, %v682
      %v696 = vpack.c.bf16 %v685, %v684
      %v697 = vpack.c.bf16 %v687, %v686
      %v698 = vpack.c.bf16 %v689, %v688
      %v699 = vpack.c.bf16 %v691, %v690
      %v700 = vld [vmem:[%s5] sm:$0xf]
      %v701 = vld [vmem:[%s5 + $0x4] sm:$0xf]
      %v702 = vld [vmem:[%s5 + $0x8] sm:$0xf]
      %v703 = vld [vmem:[%s5 + $0xc] sm:$0xf]
      %v704 = vld [vmem:[%s5 + $0x10] sm:$0xf]
      %v705 = vld [vmem:[%s5 + $0x14] sm:$0xf]
      %v706 = vld [vmem:[%s5 + $0x18] sm:$0xf]
      %v707 = vld [vmem:[%s5 + $0x1c] sm:$0xf]
      %v708 = vld [vmem:[%s5 + $0x20] sm:$0xf]
      %v709 = vld [vmem:[%s5 + $0x24] sm:$0xf]
      %v710 = vld [vmem:[%s5 + $0x28] sm:$0xf]
      %v711 = vld [vmem:[%s5 + $0x2c] sm:$0xf]
      %v712 = vld [vmem:[%s5 + $0x30] sm:$0xf]
      %v713 = vld [vmem:[%s5 + $0x34] sm:$0xf]
      %v714 = vld [vmem:[%s5 + $0x38] sm:$0xf]
      %v715 = vld [vmem:[%s5 + $0x3c] sm:$0xf]
      %v716 = vld [vmem:[%s6] sm:$0x1]
      %v718 = vlaneseq
      %v719 = vshrl.u32 %v718, 7
      %v720 = vsub.s32 0, %v719
      %v721 = vrot.slane %v716, %v720
      %v739 = vunpack.c.l.b16 %v700
      %v740 = vunpack.c.l.b16 %v701
      %v741 = vunpack.c.l.b16 %v702
      %v742 = vunpack.c.l.b16 %v703
      %v743 = vunpack.c.l.b16 %v704
      %v744 = vunpack.c.l.b16 %v705
      %v745 = vunpack.c.l.b16 %v706
      %v746 = vunpack.c.l.b16 %v707
      %v747 = vunpack.c.l.b16 %v708
      %v748 = vunpack.c.l.b16 %v709
      %v749 = vunpack.c.l.b16 %v710
      %v750 = vunpack.c.l.b16 %v711
      %v751 = vunpack.c.l.b16 %v712
      %v752 = vunpack.c.l.b16 %v713
      %v753 = vunpack.c.l.b16 %v714
      %v754 = vunpack.c.l.b16 %v715
      %v755 = vpack.c.b16 %v740, %v739
      %v756 = vpack.c.b16 %v742, %v741
      %v757 = vpack.c.b16 %v744, %v743
      %v758 = vpack.c.b16 %v746, %v745
      %v759 = vpack.c.b16 %v748, %v747
      %v760 = vpack.c.b16 %v750, %v749
      %v761 = vpack.c.b16 %v752, %v751
      %v762 = vpack.c.b16 %v754, %v753
      %771 = vmatprep.subr.bf16.mxu0 0
      %772 = vmatpush1.bf16.msra.mxu0 %v755
      %773 = vmatprep.subr.bf16.mxu0 0
      %774 = vmatpush1.bf16.msra.mxu0 %v756
      %775 = vmatprep.subr.bf16.mxu0 0
      %776 = vmatpush1.bf16.msra.mxu0 %v757
      %777 = vmatprep.subr.bf16.mxu0 0
      %778 = vmatpush1.bf16.msra.mxu0 %v758
      %779 = vmatprep.subr.bf16.mxu0 0
      %780 = vmatpush1.bf16.msra.mxu0 %v759
      %781 = vmatprep.subr.bf16.mxu0 0
      %782 = vmatpush1.bf16.msra.mxu0 %v760
      %783 = vmatprep.subr.bf16.mxu0 0
      %784 = vmatpush1.bf16.msra.mxu0 %v761
      %785 = vmatprep.subr.bf16.mxu0 0
      %786 = vmatpush1.bf16.msra.mxu0 %v762
      %787 = vmatprep.subr.bf16.mxu0 0
      %788 = vmatpush1.bf16.msra.mxu0 0
      %789 = vmatprep.subr.bf16.mxu0 0
      %790 = vmatpush1.bf16.msra.mxu0 0
      %791 = vmatprep.subr.bf16.mxu0 0
      %792 = vmatpush1.bf16.msra.mxu0 0
      %793 = vmatprep.subr.bf16.mxu0 0
      %794 = vmatpush1.bf16.msra.mxu0 0
      %795 = vmatprep.subr.bf16.mxu0 0
      %796 = vmatpush1.bf16.msra.mxu0 0
      %797 = vmatprep.subr.bf16.mxu0 0
      %798 = vmatpush1.bf16.msra.mxu0 0
      %799 = vmatprep.subr.bf16.mxu0 0
      %800 = vmatpush1.bf16.msra.mxu0 0
      %801 = vmatprep.subr.bf16.mxu0 0
      %802 = vmatpush1.bf16.msra.mxu0 0
      %803 = vmatprep.mubr.bf16.mxu0 0
      %804 = vmatmul.mubr.bf16.gmra.mrb[0].mxu0 %v692
      %v805 = vpop.f32.mrb[0].mxu0
      %v806 = vadd.f32 %v721, %v805
      %v807 = vpop.f32.mrb[0].mxu0
      %v808 = vpop.f32.mrb[0].mxu0
      %v809 = vadd.f32 %v721, %v808
      %v810 = vpop.f32.mrb[0].mxu0
      %811 = vmatprep.mubr.bf16.mxu0 0
      %812 = vmatmul.mubr.bf16.gmra.mrb[0].mxu0 %v693
      %v813 = vpop.f32.mrb[0].mxu0
      %v814 = vadd.f32 %v721, %v813
      %v815 = vpop.f32.mrb[0].mxu0
      %v816 = vpop.f32.mrb[0].mxu0
      %v817 = vadd.f32 %v721, %v816
      %v818 = vpop.f32.mrb[0].mxu0
      %819 = vmatprep.mubr.bf16.mxu0 0
      %820 = vmatmul.mubr.bf16.gmra.mrb[0].mxu0 %v694
      %v821 = vpop.f32.mrb[0].mxu0
      %v822 = vadd.f32 %v721, %v821
      %v823 = vpop.f32.mrb[0].mxu0
      %v824 = vpop.f32.mrb[0].mxu0
      %v825 = vadd.f32 %v721, %v824
      %v826 = vpop.f32.mrb[0].mxu0
      %827 = vmatprep.mubr.bf16.mxu0 0
      %828 = vmatmul.mubr.bf16.gmra.mrb[0].mxu0 %v695
      %v829 = vpop.f32.mrb[0].mxu0
      %v830 = vadd.f32 %v721, %v829
      %v831 = vpop.f32.mrb[0].mxu0
      %v832 = vpop.f32.mrb[0].mxu0
      %v833 = vadd.f32 %v721, %v832
      %v834 = vpop.f32.mrb[0].mxu0
      %835 = vmatprep.mubr.bf16.mxu0 0
      %836 = vmatmul.mubr.bf16.gmra.mrb[0].mxu0 %v696
      %v837 = vpop.f32.mrb[0].mxu0
      %v838 = vadd.f32 %v721, %v837
      %v839 = vpop.f32.mrb[0].mxu0
      %v840 = vpop.f32.mrb[0].mxu0
      %v841 = vadd.f32 %v721, %v840
      %v842 = vpop.f32.mrb[0].mxu0
      %843 = vmatprep.mubr.bf16.mxu0 0
      %844 = vmatmul.mubr.bf16.gmra.mrb[0].mxu0 %v697
      %v845 = vpop.f32.mrb[0].mxu0
      %v846 = vadd.f32 %v721, %v845
      %v847 = vpop.f32.mrb[0].mxu0
      %v848 = vpop.f32.mrb[0].mxu0
      %v849 = vadd.f32 %v721, %v848
      %v850 = vpop.f32.mrb[0].mxu0
      %851 = vmatprep.mubr.bf16.mxu0 0
      %852 = vmatmul.mubr.bf16.gmra.mrb[0].mxu0 %v698
      %v853 = vpop.f32.mrb[0].mxu0
      %v854 = vadd.f32 %v721, %v853
      %v855 = vpop.f32.mrb[0].mxu0
      %v856 = vpop.f32.mrb[0].mxu0
      %v857 = vadd.f32 %v721, %v856
      %v858 = vpop.f32.mrb[0].mxu0
      %859 = vmatprep.mubr.bf16.mxu0 0
      %860 = vmatmul.mubr.bf16.gmra.mrb[0].mxu0 %v699
      %v861 = vpop.f32.mrb[0].mxu0
      %v862 = vadd.f32 %v721, %v861
      %v863 = vpop.f32.mrb[0].mxu0
      %v864 = vpop.f32.mrb[0].mxu0
      %v865 = vadd.f32 %v721, %v864
      %v866 = vpop.f32.mrb[0].mxu0
      %867 = vdwg.mxu0
      %vm868 = vcmask 64512
      %869 = vst.msk [vmem:[%s280] sm:$0xff] %vm868, %v806
      %870 = vst.msk [vmem:[%s280 + $0x8] sm:$0xff] %vm868, %v809
      %871 = vst.msk [vmem:[%s280 + $0x10] sm:$0xff] %vm868, %v814
      %872 = vst.msk [vmem:[%s280 + $0x18] sm:$0xff] %vm868, %v817
      %873 = vst.msk [vmem:[%s280 + $0x20] sm:$0xff] %vm868, %v822
      %874 = vst.msk [vmem:[%s280 + $0x28] sm:$0xff] %vm868, %v825
      %875 = vst.msk [vmem:[%s280 + $0x30] sm:$0xff] %vm868, %v830
      %876 = vst.msk [vmem:[%s280 + $0x38] sm:$0xff] %vm868, %v833
      %877 = vst.msk [vmem:[%s280 + $0x40] sm:$0xff] %vm868, %v838
      %878 = vst.msk [vmem:[%s280 + $0x48] sm:$0xff] %vm868, %v841
      %879 = vst.msk [vmem:[%s280 + $0x50] sm:$0xff] %vm868, %v846
      %880 = vst.msk [vmem:[%s280 + $0x58] sm:$0xff] %vm868, %v849
      %881 = vst.msk [vmem:[%s280 + $0x60] sm:$0xff] %vm868, %v854
      %882 = vst.msk [vmem:[%s280 + $0x68] sm:$0xff] %vm868, %v857
      %883 = vst.msk [vmem:[%s280 + $0x70] sm:$0xff] %vm868, %v862
      %884 = vst.msk [vmem:[%s280 + $0x78] sm:$0xff] %vm868, %v865
      %s885 = smul.u32 16, %s18
      %p886 = scmp.lt.s32.totalorder %s885, 63
      %s887 = scalar_select %p886, %s885, 63
      %s888 = smul.addr %s887, 8
      %s889 = scalar_lea.vmem %s7, %s888
      // Predicated region
      $region49: #{tpu_custom_call.1} parent=47 // pred_check
        %p890 = pneg %p188
      $region50: #{tpu_custom_call.1} parent=47 // pred_check_branch
        %892 = sbr.rel (%p890) target = $region52
      $region51: #{tpu_custom_call.1} parent=47 // pred_region
        %s893 = smul.u32 16, %s18
      $region52: #{tpu_custom_call.1} parent=47 // pred_fallthru
        _
    $region48: #{tpu_custom_call.1} parent=5 // pred_fallthru
      _
    %p894 = scmp.le.s32.totalorder 2, %s13
    // Predicated region
    $region53: #{tpu_custom_call.1} parent=5 // pred_check
      %p895 = pneg %p894
    $region54: #{tpu_custom_call.1} parent=5 // pred_check_branch
      %897 = sbr.rel (%p895) target = $region56
    $region55: #{tpu_custom_call.1} parent=5 // pred_region
      %s898 = ssub.s32 %s13, 2
      // Predicated region
      $region57: #{tpu_custom_call.1} parent=55 // pred_check
        %p899 = pneg %p194
      $region58: #{tpu_custom_call.1} parent=55 // pred_check_branch
        %901 = sbr.rel (%p899) target = $region60
      $region59: #{tpu_custom_call.1} parent=55 // pred_region
        %s902 = smul.u32 16, %s19
        %p903 = scmp.lt.s32.totalorder %s902, 63
        %s904 = scalar_select %p903, %s902, 63
        %s905 = smul.addr %s904, 8
        %s906 = scalar_lea.vmem %s7, %s905
      $region60: #{tpu_custom_call.1} parent=55 // pred_fallthru
        _
    $region56: #{tpu_custom_call.1} parent=5 // pred_fallthru
      _
  $region6: #{tpu_custom_call.1} parent=0 // loop_footer
    %s17 = sadd.s32 1, %s13
  $region7: #{tpu_custom_call.1} parent=0 // loop_footer_branch
    %12 = sbr.rel target = $region3
  $region8: #{tpu_custom_call.1} parent=0 // loop_exit
    _

</llo_original>
